<compile_context>
chip_gen: v7x
topology: tpu7x:2x2x1
jax: 0.10.0
libtpu: 0.0.40
codegen_flags: <defaults>
</compile_context>

<pallas_src>
import math

import numpy as np
import jax
import jax.numpy as jnp
from jax import lax
from jax.experimental import pallas as pl
from jax.experimental.pallas import tpu as pltpu


def _conv3x3_prelu_kernel(alpha_ref, bias_ref, x_ref, w_ref, out_ref):
    # alpha_ref: (1,)                   SMEM f32  (PReLU slope)
    # bias_ref : (1, W*Cout)            VMEM f32  (bias tiled across W)
    # x_ref    : (TH, 3*(W+2)*Cin)      VMEM bf16 (row-shifted lane-concat rows)
    # w_ref    : (3*(W+2)*Cin, W*Cout)  VMEM bf16 (fused banded conv weight)
    # out_ref  : (TH, W*Cout)           VMEM f32
    acc = jnp.dot(x_ref[...], w_ref[...], preferred_element_type=jnp.float32)
    acc = acc + bias_ref[...]
    alpha = alpha_ref[0]
    out_ref[...] = jnp.where(acc > 0, acc, alpha * acc).astype(out_ref.dtype)


def _tile_and_vmem(H, in_lanes, out_lanes, w_bytes, in_elem_bytes):
    """Pick the row tile TH and a VMEM limit from actual buffer sizes."""
    try:
        kind = jax.devices()[0].device_kind.lower()
    except Exception:  # pragma: no cover - defensive
        kind = ""
    # v5e / v6e have 128 MiB physical VMEM, v7x-class parts only 64 MiB.
    cap = (56 << 20) if "7" in kind else (100 << 20)

    # Constant blocks (weight + bias) are double-buffered by default.
    const_bytes = 2 * w_bytes + 2 * out_lanes * 4
    budget = cap - const_bytes - (4 << 20)

    th = H  # fallback: single row block (always legal, block == full dim)
    for t in (512, 256, 128, 64, 32, 16, 8):
        if H % t == 0:
            per_step = 2 * t * in_lanes * in_elem_bytes + 2 * t * out_lanes * 4
            if per_step <= budget:
                th = t
                break

    need = const_bytes + 2 * th * in_lanes * in_elem_bytes + 2 * th * out_lanes * 4
    vmem_limit = int(min(cap, max(32 << 20, 2 * need + (8 << 20))))
    return th, vmem_limit


def conv_block(x_nchw, weight, bias, alpha, *, block_rows=None):
    """Conv2d(Cin, Cout, kernel=3, stride=1, padding=1) + PReLU.

    x_nchw: (N, Cin, H, W); weight: (Cout, Cin, 3, 3) (PyTorch layout);
    bias: (Cout,); alpha: scalar PReLU slope.  Returns (N, Cout, H, W).
    """
    N, Cin, H, W = x_nchw.shape
    Cout = weight.shape[0]
    Hp, Wp = H + 2, W + 2
    K = 3 * Wp * Cin          # fused contraction depth (dh x dw x Cin)
    out_lanes = W * Cout      # keep a multiple of 128 for unmasked stores

    # ---- layout prep (plain JAX; NCHW in/out kept for API fidelity) -------
    x = jnp.transpose(x_nchw, (0, 2, 3, 1)).astype(jnp.float32)        # NHWC
    xpad = jnp.pad(x, ((0, 0), (1, 1), (1, 1), (0, 0)))
    xflat = xpad.reshape(N, Hp, Wp * Cin)                              # lane-dense rows
    # Row-shifted lane concat: xcat[n, h] = [row h | row h+1 | row h+2].
    xcat = jnp.concatenate([xflat[:, dh:dh + H, :] for dh in range(3)],
                           axis=-1).astype(jnp.bfloat16)               # (N, H, K)

    # Fused banded weight:
    #   w_cat[dh*Wp*Cin + (j+dw)*Cin + ci, j*Cout + co] = W[co, ci, dh, dw]
    sel = np.zeros((3, W, Wp), np.float32)
    for dw in range(3):
        sel[dw, np.arange(W), np.arange(W) + dw] = 1.0
    wt = jnp.transpose(weight, (2, 3, 1, 0)).astype(jnp.float32)       # (3,3,Cin,Cout)
    w_band = jnp.einsum('wjp,hwio->hpijo', jnp.asarray(sel), wt)       # (3,Wp,Cin,W,Cout)
    w_cat = w_band.reshape(K, out_lanes).astype(jnp.bfloat16)          # (K, W*Cout)

    bias_t = jnp.tile(bias.astype(jnp.float32), W).reshape(1, out_lanes)
    alpha_arr = jnp.asarray(alpha, jnp.float32).reshape(1)

    # ---- row tiling & VMEM budget ------------------------------------------
    th_auto, vmem_limit = _tile_and_vmem(
        H, in_lanes=K, out_lanes=out_lanes,
        w_bytes=K * out_lanes * 2, in_elem_bytes=2)
    TH = block_rows if block_rows is not None else th_auto
    assert H % TH == 0, "H must be divisible by the row-block size"
    grid = (N, H // TH)

    out = pl.pallas_call(
        _conv3x3_prelu_kernel,
        out_shape=jax.ShapeDtypeStruct((N, H, out_lanes), jnp.float32),
        grid_spec=pltpu.PrefetchScalarGridSpec(
            num_scalar_prefetch=0,
            grid=grid,
            in_specs=[
                pl.BlockSpec(memory_space=pltpu.MemorySpace.SMEM),       # alpha
                pl.BlockSpec((1, out_lanes), lambda n, r: (0, 0)),       # bias
                pl.BlockSpec((None, TH, K), lambda n, r: (n, r, 0)),     # image rows
                pl.BlockSpec((K, out_lanes), lambda n, r: (0, 0)),       # fused weight
            ],
            out_specs=pl.BlockSpec((None, TH, out_lanes), lambda n, r: (n, r, 0)),
        ),
        compiler_params=pltpu.CompilerParams(
            dimension_semantics=("parallel", "parallel"),
            vmem_limit_bytes=vmem_limit),
    )(alpha_arr, bias_t, xcat, w_cat)

    # (N, H, W*Cout) -> NCHW
    y = out.reshape(N, H, W, Cout)
    return jnp.transpose(y, (0, 3, 1, 2))


def _reference(x_nchw, weight, bias, alpha):
    """Pure-JAX Conv2d(k=3, s=1, p=1) + PReLU reference (NCHW, f32 HIGHEST)."""
    y = lax.conv_general_dilated(
        x_nchw.astype(jnp.float32), weight.astype(jnp.float32),
        window_strides=(1, 1), padding=[(1, 1), (1, 1)],
        dimension_numbers=('NCHW', 'OIHW', 'NCHW'),
        precision=lax.Precision.HIGHEST)
    y = y + bias.reshape(1, -1, 1, 1)
    return jnp.where(y > 0, y, alpha * y)


if __name__ == "__main__":
    key = jax.random.PRNGKey(0)
    k1, k2, k3 = jax.random.split(key, 3)

    N, Cin, Cout, H, W = 2, 4, 8, 16, 16

    x = jax.random.normal(k1, (N, Cin, H, W), jnp.float32)
    # Deterministic parameter init (shapes follow nn.Conv2d(Cin, Cout, 3, 1, 1))
    fan_in = Cin * 3 * 3
    bound = 1.0 / math.sqrt(fan_in)
    weight = jax.random.uniform(k2, (Cout, Cin, 3, 3), jnp.float32, -bound, bound)
    bias = jax.random.uniform(k3, (Cout,), jnp.float32, -bound, bound)
    alpha = 0.25  # nn.PReLU() default init

    fwd = jax.jit(conv_block)
    out = jax.block_until_ready(fwd(x, weight, bias, alpha))
    ref = _reference(x, weight, bias, alpha)

    assert out.shape == (N, Cout, H, W), out.shape
    # bf16 operands + f32 accumulation vs. an f32 HIGHEST-precision reference:
    # worst-case deviation at these sizes is ~4e-3, well inside 1e-2.
    assert jnp.allclose(out, ref, atol=1e-2, rtol=1e-2), \
        float(jnp.max(jnp.abs(out - ref)))
    print("KERNEL_OK")
</pallas_src>

<mosaic_0001>
module attributes {stable_mosaic.version = 11 : i64} {
  func.func @_conv3x3_prelu_kernel(%arg0: i32, %arg1: i32, %arg2: memref<1xf32, #tpu.memory_space<smem>>, %arg3: memref<1x128xf32, #tpu.memory_space<vmem>>, %arg4: memref<1x16x216xbf16, #tpu.memory_space<vmem>>, %arg5: memref<216x128xbf16, #tpu.memory_space<vmem>>, %arg6: memref<1x16x128xf32, #tpu.memory_space<vmem>>) attributes {dimension_semantics = [#tpu.dimension_semantics<parallel>, #tpu.dimension_semantics<parallel>], iteration_bounds = array<i64: 2, 1>, scalar_prefetch = 0 : i64, scratch_operands = 0 : i64, tpu.core_type = #tpu.core_type<tc>, window_params = [{transform_indices = @transform_0, window_bounds = array<i64: 1>}, {pipeline_mode = #tpu.pipeline_mode<synchronous>, transform_indices = @transform_1, window_bounds = array<i64: 1, 128>}, {transform_indices = @transform_2, window_bounds = array<i64: 1, 16, 216>}, {pipeline_mode = #tpu.pipeline_mode<synchronous>, transform_indices = @transform_3, window_bounds = array<i64: 216, 128>}, {transform_indices = @transform_4, window_bounds = array<i64: 1, 16, 128>}]} {
    %c0 = arith.constant 0 : index
    %c0_0 = arith.constant 0 : index
    %c0_1 = arith.constant 0 : index
    %0 = vector.load %arg4[%c0, %c0_0, %c0_1] : memref<1x16x216xbf16, #tpu.memory_space<vmem>>, vector<1x16x216xbf16>
    %1 = vector.shape_cast %0 : vector<1x16x216xbf16> to vector<16x216xbf16>
    %c0_2 = arith.constant 0 : index
    %c0_3 = arith.constant 0 : index
    %2 = vector.load %arg5[%c0_2, %c0_3] : memref<216x128xbf16, #tpu.memory_space<vmem>>, vector<216x128xbf16>
    %cst = arith.constant dense<0.000000e+00> : vector<16x128xf32>
    %3 = tpu.matmul %1, %2, %cst {dimension_numbers = #tpu.dot_dimension_numbers<[1], [0], [0], [1], [0, 0, 1, 1], [], []>} : vector<16x216xbf16>, vector<216x128xbf16>, vector<16x128xf32> -> vector<16x128xf32>
    %c0_4 = arith.constant 0 : index
    %c0_5 = arith.constant 0 : index
    %4 = vector.load %arg3[%c0_4, %c0_5] : memref<1x128xf32, #tpu.memory_space<vmem>>, vector<1x128xf32>
    %5 = vector.broadcast %4 : vector<1x128xf32> to vector<16x128xf32>
    %6 = arith.addf %3, %5 : vector<16x128xf32>
    %c0_6 = arith.constant 0 : index
    %7 = memref.load %arg2[%c0_6] : memref<1xf32, #tpu.memory_space<smem>>
    %cst_7 = arith.constant 0.000000e+00 : f32
    %8 = vector.broadcast %cst_7 : f32 to vector<16x128xf32>
    %9 = arith.cmpf ogt, %6, %8 : vector<16x128xf32>
    %10 = vector.broadcast %7 : f32 to vector<16x128xf32>
    %11 = arith.mulf %10, %6 : vector<16x128xf32>
    %12 = arith.select %9, %6, %11 : vector<16x128xi1>, vector<16x128xf32>
    %c0_8 = arith.constant 0 : index
    %c0_9 = arith.constant 0 : index
    %c0_10 = arith.constant 0 : index
    %13 = vector.load %arg6[%c0_8, %c0_9, %c0_10] : memref<1x16x128xf32, #tpu.memory_space<vmem>>, vector<1x16x128xf32>
    %14 = vector.shape_cast %13 : vector<1x16x128xf32> to vector<16x128xf32>
    %15 = vector.shape_cast %12 : vector<16x128xf32> to vector<1x16x128xf32>
    tpu.vector_store %arg6[%c0_8, %c0_9, %c0_10], %15 {strides = array<i32>} : memref<1x16x128xf32, #tpu.memory_space<vmem>>, vector<1x16x128xf32>,
    return
  }
  func.func @transform_0(%arg0: i32, %arg1: i32) -> i32 {
    %c0_i32 = arith.constant 0 : i32
    %c0_i32_0 = arith.constant 0 : i32
    return %c0_i32 : i32
  }
  func.func @transform_1(%arg0: i32, %arg1: i32) -> (i32, i32) {
    %c0_i32 = arith.constant 0 : i32
    %c0_i32_0 = arith.constant 0 : i32
    %c0_i32_1 = arith.constant 0 : i32
    return %c0_i32, %c0_i32_0 : i32, i32
  }
  func.func @transform_2(%arg0: i32, %arg1: i32) -> (i32, i32, i32) {
    %c0_i32 = arith.constant 0 : i32
    %c0_i32_0 = arith.constant 0 : i32
    return %arg0, %arg1, %c0_i32 : i32, i32, i32
  }
  func.func @transform_3(%arg0: i32, %arg1: i32) -> (i32, i32) {
    %c0_i32 = arith.constant 0 : i32
    %c0_i32_0 = arith.constant 0 : i32
    %c0_i32_1 = arith.constant 0 : i32
    return %c0_i32, %c0_i32_0 : i32, i32
  }
  func.func @transform_4(%arg0: i32, %arg1: i32) -> (i32, i32, i32) {
    %c0_i32 = arith.constant 0 : i32
    %c0_i32_0 = arith.constant 0 : i32
    return %arg0, %arg1, %c0_i32 : i32, i32, i32
  }
}

</mosaic_0001>

<llo_original>
// kernel: tile.8
$region0: #{tile.8}
  #allocation0 [shape = 's32[1]{0}', space=sflag, size = 0x4, scoped, tag = 'scoped memory for tile.8']
  %s0 = inlined_call_operand.vmem [shape: f32[8], index: 0, kind: input, shape index: {}]
  %s1 = inlined_call_operand.vmem [shape: f32[16,8], index: 1, kind: output, shape index: {}]
  // Predicated region
  $region2: #{tile.8} parent=0 // pred_check
    _
  $region3: #{tile.8} parent=0 // pred_check_branch
    %3 = sbr.rel (0) target = $region5
  $region4: #{tile.8} parent=0 // pred_region
    _
  $region5: #{tile.8} parent=0 // pred_fallthru
    _
  %v4 = vld [vmem:[%s0] ss:$0 sm:$0xff]
  %5 = vst [vmem:[%s1] sm:$0xff] %v4
  %s6 = scalar_lea.vmem %s1, 8
  %7 = vst [vmem:[%s6] sm:$0xff] %v4

// kernel: tile.9
$region0: #{tile.9}
  %s0 = inlined_call_operand.vmem [shape: f32[16,8], index: 0, kind: input, shape index: {}]
  %s1 = inlined_call_operand.vmem [shape: f32[1,128], index: 1, kind: output, shape index: {}]
  $region1: #{tile.9} parent=0
    #allocation0 [shape = 'u8[4096]{0}', space=vmem, size = 0x1000, scoped, tag = 'scoped mem for output reshape']
    %v2 = vld [vmem:[%s0] sm:$0x1]
    %vm3 = vcmask 64512
    %4 = vst.msk [vmem:[#allocation0] sm:$0x1] %vm3, %v2
    %s5 = scalar_lea.vmem %s0, 15
    %v6 = vld [vmem:[%s5] sm:$0x1]
    %7 = vrot.lane.b32.xlu0 %v6, 120
    %v8 = vpop.permute.xlu0 %7
    %vm9 = vcmask 1048512
    %10 = vst.msk [vmem:[#allocation0] sm:$0x1] %vm9, %v8
    %s11 = scalar_lea.vmem %s0, 14
    %v12 = vld [vmem:[%s11] sm:$0x1]
    %13 = vrot.lane.b32.xlu0 %v12, 112
    %v14 = vpop.permute.xlu0 %13
    %vm15 = vcmask 982912
    %16 = vst.msk [vmem:[#allocation0] sm:$0x1] %vm15, %v14
    %s17 = scalar_lea.vmem %s0, 13
    %v18 = vld [vmem:[%s17] sm:$0x1]
    %19 = vrot.lane.b32.xlu0 %v18, 104
    %v20 = vpop.permute.xlu0 %19
    %vm21 = vcmask 917312
    %22 = vst.msk [vmem:[#allocation0] sm:$0x1] %vm21, %v20
    %s23 = scalar_lea.vmem %s0, 12
    %v24 = vld [vmem:[%s23] sm:$0x1]
    %25 = vrot.lane.b32.xlu0 %v24, 96
    %v26 = vpop.permute.xlu0 %25
    %vm27 = vcmask 851712
    %28 = vst.msk [vmem:[#allocation0] sm:$0x1] %vm27, %v26
    %s29 = scalar_lea.vmem %s0, 11
    %v30 = vld [vmem:[%s29] sm:$0x1]
    %31 = vrot.lane.b32.xlu0 %v30, 88
    %v32 = vpop.permute.xlu0 %31
    %vm33 = vcmask 786112
    %34 = vst.msk [vmem:[#allocation0] sm:$0x1] %vm33, %v32
    %s35 = scalar_lea.vmem %s0, 10
    %v36 = vld [vmem:[%s35] sm:$0x1]
    %37 = vrot.lane.b32.xlu0 %v36, 80
    %v38 = vpop.permute.xlu0 %37
    %vm39 = vcmask 720512
    %40 = vst.msk [vmem:[#allocation0] sm:$0x1] %vm39, %v38
    %s41 = scalar_lea.vmem %s0, 9
    %v42 = vld [vmem:[%s41] sm:$0x1]
    %43 = vrot.lane.b32.xlu0 %v42, 72
    %v44 = vpop.permute.xlu0 %43
    %vm45 = vcmask 654912
    %46 = vst.msk [vmem:[#allocation0] sm:$0x1] %vm45, %v44
    %s47 = scalar_lea.vmem %s0, 8
    %v48 = vld [vmem:[%s47] sm:$0x1]
    %49 = vrot.lane.b32.xlu0 %v48, 64
    %v50 = vpop.permute.xlu0 %49
    %vm51 = vcmask 589312
    %52 = vst.msk [vmem:[#allocation0] sm:$0x1] %vm51, %v50
    %s53 = scalar_lea.vmem %s0, 7
    %v54 = vld [vmem:[%s53] sm:$0x1]
    %55 = vrot.lane.b32.xlu0 %v54, 56
    %v56 = vpop.permute.xlu0 %55
    %vm57 = vcmask 523712
    %58 = vst.msk [vmem:[#allocation0] sm:$0x1] %vm57, %v56
    %s59 = scalar_lea.vmem %s0, 6
    %v60 = vld [vmem:[%s59] sm:$0x1]
    %61 = vrot.lane.b32.xlu0 %v60, 48
    %v62 = vpop.permute.xlu0 %61
    %vm63 = vcmask 458112
    %64 = vst.msk [vmem:[#allocation0] sm:$0x1] %vm63, %v62
    %s65 = scalar_lea.vmem %s0, 5
    %v66 = vld [vmem:[%s65] sm:$0x1]
    %67 = vrot.lane.b32.xlu0 %v66, 40
    %v68 = vpop.permute.xlu0 %67
    %vm69 = vcmask 392512
    %70 = vst.msk [vmem:[#allocation0] sm:$0x1] %vm69, %v68
    %s71 = scalar_lea.vmem %s0, 4
    %v72 = vld [vmem:[%s71] sm:$0x1]
    %73 = vrot.lane.b32.xlu0 %v72, 32
    %v74 = vpop.permute.xlu0 %73
    %vm75 = vcmask 326912
    %76 = vst.msk [vmem:[#allocation0] sm:$0x1] %vm75, %v74
    %s77 = scalar_lea.vmem %s0, 3
    %v78 = vld [vmem:[%s77] sm:$0x1]
    %79 = vrot.lane.b32.xlu0 %v78, 24
    %v80 = vpop.permute.xlu0 %79
    %vm81 = vcmask 261312
    %82 = vst.msk [vmem:[#allocation0] sm:$0x1] %vm81, %v80
    %s83 = scalar_lea.vmem %s0, 2
    %v84 = vld [vmem:[%s83] sm:$0x1]
    %85 = vrot.lane.b32.xlu0 %v84, 16
    %v86 = vpop.permute.xlu0 %85
    %vm87 = vcmask 195712
    %88 = vst.msk [vmem:[#allocation0] sm:$0x1] %vm87, %v86
    %s89 = scalar_lea.vmem %s0, 1
    %v90 = vld [vmem:[%s89] sm:$0x1]
    %91 = vrot.lane.b32.xlu0 %v90, 8
    %v92 = vpop.permute.xlu0 %91
    %vm93 = vcmask 130112
    %94 = vst.msk [vmem:[#allocation0] sm:$0x1] %vm93, %v92
    %s96 = sshllo.u32 0, 1
    %v98 = vld [vmem:[#allocation0] sm:%s96]
    %s99 = sshllo.u32 0, 1
    %100 = vst [vmem:[%s1] sm:%s99] %v98

// kernel: conv_block.1
$region0: #{conv_block.1}
  #allocation0 [shape = 'u32[]', space=smem, size = 0x4, offset = 0x4, fixed_abs, tag = 'smem constant byte address 0x4 - core index']
  #allocation1 [shape = 'u32[144,128]{1,0:T(1,128)}', space=vmem, size = 0x12000, scoped, tag = 'internal scratch']
  #allocation2 [shape = 'f32[1]{0:T(128)S(6)}', space=smem, size = 0x200, scoped, tag = 'scoped memory for conv_block.1']
  %s0 = inlined_call_operand.<no memory space> [shape: f32[1], index: 0, kind: input, shape index: {}]
  %s1 = inlined_call_operand.vmem [shape: f32[1,128], index: 1, kind: input, shape index: {}]
  %s2 = inlined_call_operand.vmem [shape: bf16[2,16,216], index: 2, kind: input, shape index: {}]
  %s3 = inlined_call_operand.vmem [shape: bf16[216,128], index: 3, kind: input, shape index: {}]
  %s4 = inlined_call_operand.vmem [shape: f32[2,16,128], index: 4, kind: output, shape index: {}]
  %s5 = sld [smem:[#allocation0]]
  $region49: #{conv_block.1} parent=0
    _
  %s7 = ssub.s32 1, %s5
  %s8 = scalar_select 0, %s7, %s5
  %9 = sst [smem:[#allocation2]] %s0
  loop: start=0, step=1, limit=4
  $region2: #{conv_block.1} parent=0 // loop_pre_header
    _
  $region3: #{conv_block.1} parent=0 // loop_header
    %s11 = sphi 0, %s15
    %p12 = scmp.ge.s32.totalorder %s11, 4
    %s18 = sphi 0, %s30
    %s19 = sphi 0, %s26
    %s20 = sphi 0, %s18
    %s21 = sphi 0, %s19
    %s22 = sphi 0, %s20
    %s23 = sphi 0, %s21
    %s31 = sphi 0, %s31
    %s33 = sphi 0, %s31
    %s34 = sphi 0, %s33
    %s48 = sphi 0, %s34
    %s52 = sphi 0, %s52
    %s54 = sphi 0, %s52
    %s55 = sphi 0, %s54
    %s69 = sphi 0, %s55
    %s77 = sphi 0, %s79
    %s80 = sphi 0, %s77
    %s81 = sphi 0, %s80
    %s97 = sphi 0, %s81
    %s101 = sphi 0, %s101
    %s103 = sphi 0, %s101
    %s104 = sphi 0, %s103
    %s118 = sphi 0, %s104
    %s126 = sphi 0, %s128
    %s129 = sphi 0, %s126
    %s130 = sphi 0, %s129
    %s146 = sphi 0, %s130
  $region4: #{conv_block.1} parent=0 // loop_header_branch
    %14 = sbr.rel (%p12) target = $region8
  $region5: #{conv_block.1} parent=0 // loop_body
    %s16 = ssub.s32 %s11, 1
    %s17 = ssub.s32 %s11, 2
    %s24 = sadd.s32 1, %s19
    %p25 = scmp.ge.s32.totalorder %s24, 1
    %s26 = scalar_select %p25, 0, %s24
    %s27 = sadd.s32 1, %s18
    %s28 = scalar_select %p25, %s27, %s18
    %p29 = scmp.ge.s32.totalorder %s28, 2
    %s30 = scalar_select %p29, 0, %s28
    %s32 = sadd.s32 %s31, 1
    %p35 = scmp.eq.s32.totalorder %s11, 1
    %p36 = scmp.ne.s32.totalorder %s31, %s33
    %p37 = scmp.eq.s32.totalorder %s11, 0
    %p38 = por %p36, %p37
    %p39 = scmp.ne.s32.totalorder %s31, %s33
    %p40 = scmp.eq.s32.totalorder %s16, 1
    %p41 = por %p39, %p40
    %p42 = scmp.ne.s32.totalorder %s33, %s34
    %p43 = scmp.eq.s32.totalorder %s16, 0
    %p44 = por %p42, %p43
    %p45 = scmp.ne.s32.totalorder %s33, %s34
    %p46 = scmp.eq.s32.totalorder %s17, 1
    %p47 = por %p45, %p46
    %p49 = scmp.ne.s32.totalorder %s34, %s48
    %p50 = scmp.eq.s32.totalorder %s17, 0
    %p51 = por %p49, %p50
    %s53 = sadd.s32 %s52, 1
    %p56 = scmp.eq.s32.totalorder %s11, 1
    %p57 = scmp.ne.s32.totalorder %s52, %s54
    %p58 = scmp.eq.s32.totalorder %s11, 0
    %p59 = por %p57, %p58
    %p60 = scmp.ne.s32.totalorder %s52, %s54
    %p61 = scmp.eq.s32.totalorder %s16, 1
    %p62 = por %p60, %p61
    %p63 = scmp.ne.s32.totalorder %s54, %s55
    %p64 = scmp.eq.s32.totalorder %s16, 0
    %p65 = por %p63, %p64
    %p66 = scmp.ne.s32.totalorder %s54, %s55
    %p67 = scmp.eq.s32.totalorder %s17, 1
    %p68 = por %p66, %p67
    %p70 = scmp.ne.s32.totalorder %s55, %s69
    %p71 = scmp.eq.s32.totalorder %s17, 0
    %p72 = por %p70, %p71
    %s73 = ssub.s32 %s18, %s30
    %s74 = ssub.s32 %s19, %s26
    %s75 = sor.u32 %s73, %s74
    %p76 = scmp.eq.s32.totalorder %s75, 0
    %s78 = sadd.s32 %s77, 1
    %s79 = scalar_select %p76, %s77, %s78
    %p82 = pneg %p76
    %p83 = scmp.eq.s32.totalorder %s11, 1
    %p84 = por %p82, %p83
    %p85 = scmp.ne.s32.totalorder %s77, %s80
    %p86 = scmp.eq.s32.totalorder %s11, 0
    %p87 = por %p85, %p86
    %p88 = scmp.ne.s32.totalorder %s77, %s80
    %p89 = scmp.eq.s32.totalorder %s16, 1
    %p90 = por %p88, %p89
    %p91 = scmp.ne.s32.totalorder %s80, %s81
    %p92 = scmp.eq.s32.totalorder %s16, 0
    %p93 = por %p91, %p92
    %p94 = scmp.ne.s32.totalorder %s80, %s81
    %p95 = scmp.eq.s32.totalorder %s17, 1
    %p96 = por %p94, %p95
    %p98 = scmp.ne.s32.totalorder %s81, %s97
    %p99 = scmp.eq.s32.totalorder %s17, 0
    %p100 = por %p98, %p99
    %s102 = sadd.s32 %s101, 1
    %p105 = scmp.eq.s32.totalorder %s11, 1
    %p106 = scmp.ne.s32.totalorder %s101, %s103
    %p107 = scmp.eq.s32.totalorder %s11, 0
    %p108 = por %p106, %p107
    %p109 = scmp.ne.s32.totalorder %s101, %s103
    %p110 = scmp.eq.s32.totalorder %s16, 1
    %p111 = por %p109, %p110
    %p112 = scmp.ne.s32.totalorder %s103, %s104
    %p113 = scmp.eq.s32.totalorder %s16, 0
    %p114 = por %p112, %p113
    %p115 = scmp.ne.s32.totalorder %s103, %s104
    %p116 = scmp.eq.s32.totalorder %s17, 1
    %p117 = por %p115, %p116
    %p119 = scmp.ne.s32.totalorder %s104, %s118
    %p120 = scmp.eq.s32.totalorder %s17, 0
    %p121 = por %p119, %p120
    %s122 = ssub.s32 %s18, %s30
    %s123 = ssub.s32 %s19, %s26
    %s124 = sor.u32 %s122, %s123
    %p125 = scmp.eq.s32.totalorder %s124, 0
    %s127 = sadd.s32 %s126, 1
    %s128 = scalar_select %p125, %s126, %s127
    %p131 = pneg %p125
    %p132 = scmp.eq.s32.totalorder %s11, 1
    %p133 = por %p131, %p132
    %p134 = scmp.ne.s32.totalorder %s126, %s129
    %p135 = scmp.eq.s32.totalorder %s11, 0
    %p136 = por %p134, %p135
    %p137 = scmp.ne.s32.totalorder %s126, %s129
    %p138 = scmp.eq.s32.totalorder %s16, 1
    %p139 = por %p137, %p138
    %p140 = scmp.ne.s32.totalorder %s129, %s130
    %p141 = scmp.eq.s32.totalorder %s16, 0
    %p142 = por %p140, %p141
    %p143 = scmp.ne.s32.totalorder %s129, %s130
    %p144 = scmp.eq.s32.totalorder %s17, 1
    %p145 = por %p143, %p144
    %p147 = scmp.ne.s32.totalorder %s130, %s146
    %p148 = scmp.eq.s32.totalorder %s17, 0
    %p149 = por %p147, %p148
    %p150 = scmp.le.s32.totalorder 1, %s11
    %p151 = scmp.lt.s32.totalorder %s11, 3
    %p152 = pnand %p150, %p151
    %p153 = pneg %p152
    // Predicated region
    $region9: #{conv_block.1} parent=5 // pred_check
      _
    $region10: #{conv_block.1} parent=5 // pred_check_branch
      %155 = sbr.rel (%p152) target = $region12
    $region11: #{conv_block.1} parent=5 // pred_region
      %s156 = ssub.s32 %s11, 1
      // Predicated region
      $region13: #{conv_block.1} parent=11 // pred_check
        %p157 = pneg %p44
      $region14: #{conv_block.1} parent=11 // pred_check_branch
        %159 = sbr.rel (%p157) target = $region16
      $region15: #{conv_block.1} parent=11 // pred_region
        _
      $region16: #{conv_block.1} parent=11 // pred_fallthru
        _
      // Predicated region
      $region17: #{conv_block.1} parent=11 // pred_check
        %p160 = pneg %p65
      $region18: #{conv_block.1} parent=11 // pred_check_branch
        %162 = sbr.rel (%p160) target = $region20
      $region19: #{conv_block.1} parent=11 // pred_region
        _
      $region20: #{conv_block.1} parent=11 // pred_fallthru
        _
      // Predicated region
      $region21: #{conv_block.1} parent=11 // pred_check
        %p163 = pneg %p114
      $region22: #{conv_block.1} parent=11 // pred_check_branch
        %165 = sbr.rel (%p163) target = $region24
      $region23: #{conv_block.1} parent=11 // pred_region
        _
      $region24: #{conv_block.1} parent=11 // pred_fallthru
        _
    $region12: #{conv_block.1} parent=5 // pred_fallthru
      _
    %p166 = scmp.lt.s32.totalorder %s11, 2
    // Predicated region
    $region25: #{conv_block.1} parent=5 // pred_check
      %p167 = pneg %p166
    $region26: #{conv_block.1} parent=5 // pred_check_branch
      %169 = sbr.rel (%p167) target = $region28
    $region27: #{conv_block.1} parent=5 // pred_region
      // Predicated region
      $region29: #{conv_block.1} parent=27 // pred_check
        %p170 = pneg %p87
      $region30: #{conv_block.1} parent=27 // pred_check_branch
        %172 = sbr.rel (%p170) target = $region32
      $region31: #{conv_block.1} parent=27 // pred_region
        %s173 = smul.u32 2, %s19
        %p174 = scmp.lt.s32.totalorder %s18, 1
        %s175 = scalar_select %p174, %s18, 1
        %p176 = scmp.lt.s32.totalorder %s173, 1
        %s177 = scalar_select %p176, %s173, 1
        %s178 = smul.addr %s177, 2
        %s179 = smul.addr %s175, 4
        %s180 = sadd.s32 %s178, %s179
        %s181 = smul.addr %s180, 4
        %s182 = scalar_lea.vmem %s2, %s181
        %s183 = smul.u32 2, %s19
      $region32: #{conv_block.1} parent=27 // pred_fallthru
        _
    $region28: #{conv_block.1} parent=5 // pred_fallthru
      _
    %p184 = scmp.le.s32.totalorder 1, %s11
    %p185 = scmp.lt.s32.totalorder %s11, 3
    %p186 = pnand %p184, %p185
    %p187 = pneg %p186
    // Predicated region
    $region33: #{conv_block.1} parent=5 // pred_check
      _
    $region34: #{conv_block.1} parent=5 // pred_check_branch
      %189 = sbr.rel (%p186) target = $region36
    $region35: #{conv_block.1} parent=5 // pred_region
      %s190 = ssub.s32 %s11, 1
      %p191 = pneg %p44
      %p192 = pneg %p41
      %p193 = pneg %p65
      %p194 = pneg %p62
      %s195 = smul.u32 2, %s21
      %p196 = scmp.lt.s32.totalorder %s20, 1
      %s197 = scalar_select %p196, %s20, 1
      %p198 = scmp.lt.s32.totalorder %s195, 1
      %s199 = scalar_select %p198, %s195, 1
      %s200 = smul.addr %s199, 2
      %s201 = smul.addr %s197, 4
      %s202 = sadd.s32 %s200, %s201
      %s203 = smul.addr %s202, 4
      %s204 = scalar_lea.vmem %s2, %s203
      %p205 = pneg %p93
      %p206 = pneg %p90
      %p207 = pneg %p114
      %p208 = pneg %p111
      %p209 = pneg %p142
      %p210 = pneg %p139
      %s211 = smul.u32 2, %s21
      %p212 = scmp.lt.s32.totalorder %s20, 1
      %s213 = scalar_select %p212, %s20, 1
      %p214 = scmp.lt.s32.totalorder %s211, 1
      %s215 = scalar_select %p214, %s211, 1
      %s216 = smul.addr %s213, 2
      %s217 = sadd.s32 %s215, %s216
      %s218 = smul.addr %s217, 8
      %s219 = scalar_lea.vmem %s4, %s218
      %s220 = smul.u32 2, %s21
      %p221 = scmp.lt.s32.totalorder %s20, 1
      %s222 = scalar_select %p221, %s20, 1
      %p223 = scmp.lt.s32.totalorder %s220, 1
      %s224 = scalar_select %p223, %s220, 1
      %s225 = smul.addr %s224, 2
      %s226 = smul.addr %s222, 4
      %s227 = sadd.s32 %s225, %s226
      %s228 = smul.addr %s227, 4
      %s229 = scalar_lea.vmem %s2, %s228
      %s230 = smul.u32 2, %s21
      %s231 = smul.u32 2, %s21
      %p232 = scmp.lt.s32.totalorder %s20, 1
      %s233 = scalar_select %p232, %s20, 1
      %p234 = scmp.lt.s32.totalorder %s231, 1
      %s235 = scalar_select %p234, %s231, 1
      %s236 = smul.addr %s233, 2
      %s237 = sadd.s32 %s235, %s236
      %s238 = smul.addr %s237, 8
      %s239 = scalar_lea.vmem %s4, %s238
      %s240 = smul.u32 2, %s21
      %v242 = vld [vmem:[%s229] sm:$0xff]
      %v243 = vld [vmem:[%s229 + $0x8] sm:$0xff]
      %v244 = vld [vmem:[%s3] sm:$0xf]
      %v245 = vld [vmem:[%s3 + $0x4] sm:$0xf]
      %v246 = vld [vmem:[%s3 + $0x8] sm:$0xf]
      %v247 = vld [vmem:[%s3 + $0xc] sm:$0xf]
      %v248 = vld [vmem:[%s3 + $0x10] sm:$0xf]
      %v249 = vld [vmem:[%s3 + $0x14] sm:$0xf]
      %v250 = vld [vmem:[%s3 + $0x18] sm:$0xf]
      %v251 = vld [vmem:[%s3 + $0x1c] sm:$0xf]
      %v252 = vld [vmem:[%s3 + $0x20] sm:$0xf]
      %v253 = vld [vmem:[%s3 + $0x24] sm:$0xf]
      %v254 = vld [vmem:[%s3 + $0x28] sm:$0xf]
      %v255 = vld [vmem:[%s3 + $0x2c] sm:$0xf]
      %v256 = vld [vmem:[%s3 + $0x30] sm:$0xf]
      %v257 = vld [vmem:[%s3 + $0x34] sm:$0xf]
      %v258 = vld [vmem:[%s3 + $0x38] sm:$0xf]
      %v259 = vld [vmem:[%s3 + $0x3c] sm:$0xf]
      %v260 = vld [vmem:[%s3 + $0x40] sm:$0xf]
      %v261 = vld [vmem:[%s3 + $0x44] sm:$0xf]
      %v262 = vld [vmem:[%s3 + $0x48] sm:$0xf]
      %v263 = vld [vmem:[%s3 + $0x4c] sm:$0xf]
      %v264 = vld [vmem:[%s3 + $0x50] sm:$0xf]
      %v265 = vld [vmem:[%s3 + $0x54] sm:$0xf]
      %v266 = vld [vmem:[%s3 + $0x58] sm:$0xf]
      %v267 = vld [vmem:[%s3 + $0x5c] sm:$0xf]
      %v268 = vld [vmem:[%s3 + $0x60] sm:$0xf]
      %v269 = vld [vmem:[%s3 + $0x64] sm:$0xf]
      %v270 = vld [vmem:[%s3 + $0x68] sm:$0xf]
      %v271 = vld [vmem:[%s1] sm:$0x1]
      %v273 = vlaneseq
      %v274 = vshrl.u32 %v273, 7
      %v275 = vsub.s32 0, %v274
      %v276 = vrot.slane %v271, %v275
      %v280 = vunpack.c.l.b16 %v242
      %v281 = vunpack.c.h.b16 %v242
      %v282 = vunpack.c.l.b16 %v243
      %v283 = vunpack.c.h.b16 %v243
      %v284 = vpack.c.b16 %v282, %v280
      %v285 = vpack.c.b16 %v283, %v281
      %v314 = vunpack.c.l.b16 %v244
      %v315 = vunpack.c.l.b16 %v245
      %v316 = vunpack.c.l.b16 %v246
      %v317 = vunpack.c.l.b16 %v247
      %v318 = vunpack.c.l.b16 %v248
      %v319 = vunpack.c.l.b16 %v249
      %v320 = vunpack.c.l.b16 %v250
      %v321 = vunpack.c.l.b16 %v251
      %v322 = vunpack.c.l.b16 %v252
      %v323 = vunpack.c.l.b16 %v253
      %v324 = vunpack.c.l.b16 %v254
      %v325 = vunpack.c.l.b16 %v255
      %v326 = vunpack.c.l.b16 %v256
      %v327 = vunpack.c.l.b16 %v257
      %v328 = vunpack.c.l.b16 %v258
      %v329 = vunpack.c.l.b16 %v259
      %v330 = vunpack.c.l.b16 %v260
      %v331 = vunpack.c.l.b16 %v261
      %v332 = vunpack.c.l.b16 %v262
      %v333 = vunpack.c.l.b16 %v263
      %v334 = vunpack.c.l.b16 %v264
      %v335 = vunpack.c.l.b16 %v265
      %v336 = vunpack.c.l.b16 %v266
      %v337 = vunpack.c.l.b16 %v267
      %v338 = vunpack.c.l.b16 %v268
      %v339 = vunpack.c.l.b16 %v269
      %v340 = vunpack.c.l.b16 %v270
      %v341 = vpack.c.b16 %v315, %v314
      %v342 = vpack.c.b16 %v317, %v316
      %v343 = vpack.c.b16 %v319, %v318
      %v344 = vpack.c.b16 %v321, %v320
      %v345 = vpack.c.b16 %v323, %v322
      %v346 = vpack.c.b16 %v325, %v324
      %v347 = vpack.c.b16 %v327, %v326
      %v348 = vpack.c.b16 %v329, %v328
      %v349 = vpack.c.b16 %v331, %v330
      %v350 = vpack.c.b16 %v333, %v332
      %v351 = vpack.c.b16 %v335, %v334
      %v352 = vpack.c.b16 %v337, %v336
      %v353 = vpack.c.b16 %v339, %v338
      %v354 = vpack.c.b16 %v340, %v340
      %vm368 = vcmask 719872
      %v370 = vsel %vm368, %v285, 0
      %vm372 = vcmask 1043456
      %v374 = vsel %vm372, %v354, 0
      %376 = vmatprep.subr.bf16.mxu0 0
      %377 = vmatpush1.bf16.msra.mxu0 %v341
      %378 = vmatprep.subr.bf16.mxu0 0
      %379 = vmatpush1.bf16.msra.mxu0 %v342
      %380 = vmatprep.subr.bf16.mxu0 0
      %381 = vmatpush1.bf16.msra.mxu0 %v343
      %382 = vmatprep.subr.bf16.mxu0 0
      %383 = vmatpush1.bf16.msra.mxu0 %v344
      %384 = vmatprep.subr.bf16.mxu0 0
      %385 = vmatpush1.bf16.msra.mxu0 %v345
      %386 = vmatprep.subr.bf16.mxu0 0
      %387 = vmatpush1.bf16.msra.mxu0 %v346
      %388 = vmatprep.subr.bf16.mxu0 0
      %389 = vmatpush1.bf16.msra.mxu0 %v347
      %390 = vmatprep.subr.bf16.mxu0 0
      %391 = vmatpush1.bf16.msra.mxu0 %v348
      %392 = vmatprep.subr.bf16.mxu0 0
      %393 = vmatpush1.bf16.msra.mxu0 %v349
      %394 = vmatprep.subr.bf16.mxu0 0
      %395 = vmatpush1.bf16.msra.mxu0 %v350
      %396 = vmatprep.subr.bf16.mxu0 0
      %397 = vmatpush1.bf16.msra.mxu0 %v351
      %398 = vmatprep.subr.bf16.mxu0 0
      %399 = vmatpush1.bf16.msra.mxu0 %v352
      %400 = vmatprep.subr.bf16.mxu0 0
      %401 = vmatpush1.bf16.msra.mxu0 %v353
      %402 = vmatprep.subr.bf16.mxu0 0
      %403 = vmatpush1.bf16.msra.mxu0 %v374
      %404 = vmatprep.subr.bf16.mxu0 0
      %405 = vmatpush1.bf16.msra.mxu0 0
      %406 = vmatprep.subr.bf16.mxu0 0
      %407 = vmatpush1.bf16.msra.mxu0 0
      %408 = vmatprep.mubr.bf16.mxu0 %v370
      %409 = vmatmul.mubr.bf16.gmra.mrb[0].mxu0 %v284
      %v410 = vpop.f32.mrb[0].mxu0
      %v411 = vadd.f32 %v276, %v410
      %v412 = vpop.f32.mrb[0].mxu0
      %v413 = vpop.f32.mrb[0].mxu0
      %v414 = vadd.f32 %v276, %v413
      %v415 = vpop.f32.mrb[0].mxu0
      %416 = vdwg.mxu0
      %s417 = sld [smem:[#allocation2]]
      %vm418 = vcmp.gt.f32.partialorder %v411, 0.0
      %vm419 = vcmp.gt.f32.partialorder %v414, 0.0
      %v420 = vstv %s417
      %v421 = vmul.f32 %v420, %v411
      %v422 = vmul.f32 %v420, %v414
      %v423 = vsel %vm418, %v411, %v421
      %v424 = vsel %vm419, %v414, %v422
      %425 = vst [vmem:[%s239] sm:$0xff] %v423
      %426 = vst [vmem:[%s239 + $0x8] sm:$0xff] %v424
      %s427 = smul.u32 2, %s21
      %p428 = scmp.lt.s32.totalorder %s20, 1
      %s429 = scalar_select %p428, %s20, 1
      %p430 = scmp.lt.s32.totalorder %s427, 1
      %s431 = scalar_select %p430, %s427, 1
      %s432 = smul.addr %s429, 2
      %s433 = sadd.s32 %s431, %s432
      %s434 = smul.addr %s433, 8
      %s435 = scalar_lea.vmem %s4, %s434
      // Predicated region
      $region37: #{conv_block.1} parent=35 // pred_check
        %p436 = pneg %p139
      $region38: #{conv_block.1} parent=35 // pred_check_branch
        %438 = sbr.rel (%p436) target = $region40
      $region39: #{conv_block.1} parent=35 // pred_region
        %s439 = smul.u32 2, %s21
      $region40: #{conv_block.1} parent=35 // pred_fallthru
        _
    $region36: #{conv_block.1} parent=5 // pred_fallthru
      _
    %p440 = scmp.le.s32.totalorder 2, %s11
    // Predicated region
    $region41: #{conv_block.1} parent=5 // pred_check
      %p441 = pneg %p440
    $region42: #{conv_block.1} parent=5 // pred_check_branch
      %443 = sbr.rel (%p441) target = $region44
    $region43: #{conv_block.1} parent=5 // pred_region
      %s444 = ssub.s32 %s11, 2
      // Predicated region
      $region45: #{conv_block.1} parent=43 // pred_check
        %p445 = pneg %p145
      $region46: #{conv_block.1} parent=43 // pred_check_branch
        %447 = sbr.rel (%p445) target = $region48
      $region47: #{conv_block.1} parent=43 // pred_region
        %s448 = smul.u32 2, %s23
        %p449 = scmp.lt.s32.totalorder %s22, 1
        %s450 = scalar_select %p449, %s22, 1
        %p451 = scmp.lt.s32.totalorder %s448, 1
        %s452 = scalar_select %p451, %s448, 1
        %s453 = smul.addr %s450, 2
        %s454 = sadd.s32 %s452, %s453
        %s455 = smul.addr %s454, 8
        %s456 = scalar_lea.vmem %s4, %s455
      $region48: #{conv_block.1} parent=43 // pred_fallthru
        _
    $region44: #{conv_block.1} parent=5 // pred_fallthru
      _
  $region6: #{conv_block.1} parent=0 // loop_footer
    %s15 = sadd.s32 1, %s11
  $region7: #{conv_block.1} parent=0 // loop_footer_branch
    %10 = sbr.rel target = $region3
  $region8: #{conv_block.1} parent=0 // loop_exit
    _

</llo_original>
